<compile_context>
chip_gen: v7x
topology: tpu7x:2x2x1
jax: 0.10.0
libtpu: 0.0.40
codegen_flags: <defaults>
</compile_context>

<pallas_src>
import functools
import math

import jax
import jax.numpy as jnp
from jax.experimental import pallas as pl
from jax.experimental.pallas import tpu as pltpu


LANE_W = 512          # lane-dense last dim (multiple of 128)
MAX_TILE_ROWS = 512   # (512, 512) f32 tile = 1 MiB; 2 inputs x 2 buffers = 4 MiB VMEM


def _vae_loss_kernel(out_ref, x_ref, mean_ref, logvar_ref, loss_ref, acc_ref, *,
                     batch, var_eps, tile_rows, lane_w):
    i = pl.program_id(0)

    @pl.when(i == 0)
    def _init():
        acc_ref[...] = jnp.zeros_like(acc_ref)

    # Reconstruction partial sum for this tile: pure vld + VPU ops.
    diff = out_ref[...].astype(jnp.float32) - x_ref[...].astype(jnp.float32)
    sq = diff * diff
    # Fold (tile_rows, lane_w) -> (8, lane_w) with elementwise adds only
    # (cross-lane collapse is deferred to the final step).
    partial = jnp.sum(sq.reshape(tile_rows // 8, 8, lane_w), axis=0)
    acc_ref[...] += partial

    @pl.when(i == pl.num_programs(0) - 1)
    def _finalize():
        recon = jnp.sum(acc_ref[...]) / jnp.float32(batch)
        # KL term: computed exactly once, from the resident latent block.
        mu = mean_ref[...].astype(jnp.float32)
        lv = logvar_ref[...].astype(jnp.float32)
        kl = -0.5 * jnp.sum(1.0 + lv - mu * mu - jnp.exp(lv))
        loss_ref[0, 0] = recon + kl + jnp.float32(var_eps)


def variational_loss(output, x, mean, log_var, var_eps=0.001):
    """Pallas implementation of VariationalLoss.forward."""
    assert output.shape == x.shape
    B = output.shape[0]
    n = math.prod(output.shape)

    # --- wrapper glue: lane-dense 2-D slab, rows multiple of 8 / tile_rows ---
    rows = -(-n // LANE_W)
    rows8 = ((rows + 7) // 8) * 8
    tile_rows = min(MAX_TILE_ROWS, rows8)            # multiple of 8 by construction
    padded_rows = ((rows + tile_rows - 1) // tile_rows) * tile_rows
    pad = padded_rows * LANE_W - n

    out2d = jnp.pad(output.reshape(-1), (0, pad)).reshape(padded_rows, LANE_W)
    x2d = jnp.pad(x.reshape(-1), (0, pad)).reshape(padded_rows, LANE_W)
    mean2d = mean.reshape(mean.shape[0], -1)
    lv2d = log_var.reshape(log_var.shape[0], -1)

    n_tiles = padded_rows // tile_rows

    kernel = functools.partial(
        _vae_loss_kernel, batch=B, var_eps=var_eps,
        tile_rows=tile_rows, lane_w=LANE_W)

    latent_elems = math.prod(mean.shape)
    cost = pl.CostEstimate(
        flops=3 * n + 6 * latent_elems,
        transcendentals=latent_elems,
        bytes_accessed=8 * n + 8 * latent_elems,
    )

    res = pl.pallas_call(
        kernel,
        out_shape=jax.ShapeDtypeStruct((1, 1), jnp.float32),
        grid_spec=pltpu.PrefetchScalarGridSpec(
            num_scalar_prefetch=0,
            grid=(n_tiles,),
            in_specs=[
                pl.BlockSpec((tile_rows, LANE_W), lambda i: (i, 0)),   # output tiles
                pl.BlockSpec((tile_rows, LANE_W), lambda i: (i, 0)),   # x tiles
                pl.BlockSpec(mean2d.shape, lambda i: (0, 0)),          # resident latent
                pl.BlockSpec(lv2d.shape, lambda i: (0, 0)),            # resident latent
            ],
            out_specs=pl.BlockSpec(memory_space=pltpu.SMEM),
            scratch_shapes=[pltpu.VMEM((8, LANE_W), jnp.float32)],
        ),
        compiler_params=pltpu.CompilerParams(
            dimension_semantics=("arbitrary",)),     # reduction axis (resident acc)
        cost_estimate=cost,
    )(out2d, x2d, mean2d, lv2d)
    return res[0, 0]


def _reference_loss(output, x, mean, log_var, var_eps=0.001):
    recon = jnp.sum((output - x) ** 2) / output.shape[0]
    kl = -0.5 * jnp.sum(1.0 + log_var - mean**2 - jnp.exp(log_var))
    return recon + kl + var_eps


if __name__ == "__main__":
    key = jax.random.PRNGKey(0)
    k1, k2, k3, k4 = jax.random.split(key, 4)

    B, C, H, W = 2, 4, 16, 16   # decoder output / encoder input (NCHW)
    L = 32                      # latent dim

    output = jax.random.normal(k1, (B, C, H, W), dtype=jnp.float32)
    x = jax.random.normal(k2, (B, C, H, W), dtype=jnp.float32)
    mean = jax.random.normal(k3, (B, L), dtype=jnp.float32) * 0.5
    log_var = jax.random.normal(k4, (B, L), dtype=jnp.float32) * 0.1

    loss = variational_loss(output, x, mean, log_var, var_eps=0.001)
    loss = jax.block_until_ready(loss)

    ref = _reference_loss(output, x, mean, log_var, var_eps=0.001)
    assert jnp.allclose(loss, ref, rtol=1e-5, atol=1e-5), (loss, ref)

    # Larger, multi-tile sanity check (exercises the gridded accumulator path).
    B2, C2, H2, W2 = 4, 8, 64, 64
    o2 = jax.random.normal(k1, (B2, C2, H2, W2), dtype=jnp.float32)
    x2 = jax.random.normal(k2, (B2, C2, H2, W2), dtype=jnp.float32)
    m2 = jax.random.normal(k3, (B2, L), dtype=jnp.float32) * 0.5
    lv2 = jax.random.normal(k4, (B2, L), dtype=jnp.float32) * 0.1
    loss2 = jax.block_until_ready(variational_loss(o2, x2, m2, lv2))
    ref2 = _reference_loss(o2, x2, m2, lv2)
    assert jnp.allclose(loss2, ref2, rtol=1e-4, atol=1e-4), (loss2, ref2)

    print("KERNEL_OK")
</pallas_src>

<mosaic_0001>
module attributes {stable_mosaic.version = 11 : i64} {
  func.func @_vae_loss_kernel(%arg0: i32, %arg1: memref<8x512xf32, #tpu.memory_space<vmem>>, %arg2: memref<8x512xf32, #tpu.memory_space<vmem>>, %arg3: memref<2x32xf32, #tpu.memory_space<vmem>>, %arg4: memref<2x32xf32, #tpu.memory_space<vmem>>, %arg5: memref<1x1xf32, #tpu.memory_space<smem>>, %arg6: memref<8x512xf32, #tpu.memory_space<vmem>>) attributes {dimension_semantics = [#tpu.dimension_semantics<arbitrary>], iteration_bounds = array<i64: 1>, scalar_prefetch = 0 : i64, scratch_operands = 1 : i64, tpu.core_type = #tpu.core_type<tc>, window_params = [{transform_indices = @transform_0, window_bounds = array<i64: 8, 512>}, {transform_indices = @transform_1, window_bounds = array<i64: 8, 512>}, {pipeline_mode = #tpu.pipeline_mode<synchronous>, transform_indices = @transform_2, window_bounds = array<i64: 2, 32>}, {pipeline_mode = #tpu.pipeline_mode<synchronous>, transform_indices = @transform_3, window_bounds = array<i64: 2, 32>}, {transform_indices = @transform_4, window_bounds = array<i64: 1, 1>}]} {
    %c0_i32 = arith.constant 0 : i32
    %0 = arith.cmpi eq, %arg0, %c0_i32 : i32
    %1 = arith.extui %0 : i1 to i32
    %c0_i32_0 = arith.constant 0 : i32
    %2 = arith.cmpi ne, %1, %c0_i32_0 : i32
    scf.if %2 {
      %cst_10 = arith.constant 0.000000e+00 : f32
      %15 = vector.broadcast %cst_10 : f32 to vector<8x512xf32>
      %c0_11 = arith.constant 0 : index
      %c0_12 = arith.constant 0 : index
      %16 = vector.load %arg6[%c0_11, %c0_12] : memref<8x512xf32, #tpu.memory_space<vmem>>, vector<8x512xf32>
      tpu.vector_store %arg6[%c0_11, %c0_12], %15 {strides = array<i32>} : memref<8x512xf32, #tpu.memory_space<vmem>>, vector<8x512xf32>,
    } else {
    }
    %c0 = arith.constant 0 : index
    %c0_1 = arith.constant 0 : index
    %3 = vector.load %arg1[%c0, %c0_1] : memref<8x512xf32, #tpu.memory_space<vmem>>, vector<8x512xf32>
    %c0_2 = arith.constant 0 : index
    %c0_3 = arith.constant 0 : index
    %4 = vector.load %arg2[%c0_2, %c0_3] : memref<8x512xf32, #tpu.memory_space<vmem>>, vector<8x512xf32>
    %5 = arith.subf %3, %4 : vector<8x512xf32>
    %6 = arith.mulf %5, %5 : vector<8x512xf32>
    %7 = vector.shape_cast %6 : vector<8x512xf32> to vector<1x8x512xf32>
    %cst = arith.constant dense<0.000000e+00> : vector<8x512xf32>
    %8 = vector.multi_reduction <add>, %7, %cst [0] : vector<1x8x512xf32> to vector<8x512xf32>
    %c0_4 = arith.constant 0 : index
    %c0_5 = arith.constant 0 : index
    %9 = vector.load %arg6[%c0_4, %c0_5] : memref<8x512xf32, #tpu.memory_space<vmem>>, vector<8x512xf32>
    %10 = arith.addf %9, %8 : vector<8x512xf32>
    %c0_6 = arith.constant 0 : index
    %c0_7 = arith.constant 0 : index
    %11 = vector.load %arg6[%c0_6, %c0_7] : memref<8x512xf32, #tpu.memory_space<vmem>>, vector<8x512xf32>
    tpu.vector_store %arg6[%c0_6, %c0_7], %10 {strides = array<i32>} : memref<8x512xf32, #tpu.memory_space<vmem>>, vector<8x512xf32>,
    %c0_i32_8 = arith.constant 0 : i32
    %12 = arith.cmpi eq, %arg0, %c0_i32_8 : i32
    %13 = arith.extui %12 : i1 to i32
    %c0_i32_9 = arith.constant 0 : i32
    %14 = arith.cmpi ne, %13, %c0_i32_9 : i32
    scf.if %14 {
      %c0_10 = arith.constant 0 : index
      %c0_11 = arith.constant 0 : index
      %15 = vector.load %arg6[%c0_10, %c0_11] : memref<8x512xf32, #tpu.memory_space<vmem>>, vector<8x512xf32>
      %16 = vector.shape_cast %15 : vector<8x512xf32> to vector<1x8x512xf32>
      %cst_12 = arith.constant dense<0.000000e+00> : vector<1xf32>
      %17 = vector.multi_reduction <add>, %16, %cst_12 [1, 2] : vector<1x8x512xf32> to vector<1xf32>
      %18 = vector.shape_cast %17 : vector<1xf32> to vector<1x1x1xf32>
      %19 = vector.extract %18[0, 0, 0] : f32 from vector<1x1x1xf32>
      %cst_13 = arith.constant 2.000000e+00 : f32
      %20 = arith.divf %19, %cst_13 : f32
      %c0_14 = arith.constant 0 : index
      %c0_15 = arith.constant 0 : index
      %21 = vector.load %arg3[%c0_14, %c0_15] : memref<2x32xf32, #tpu.memory_space<vmem>>, vector<2x32xf32>
      %c0_16 = arith.constant 0 : index
      %c0_17 = arith.constant 0 : index
      %22 = vector.load %arg4[%c0_16, %c0_17] : memref<2x32xf32, #tpu.memory_space<vmem>>, vector<2x32xf32>
      %cst_18 = arith.constant 1.000000e+00 : f32
      %23 = vector.broadcast %cst_18 : f32 to vector<2x32xf32>
      %24 = arith.addf %23, %22 : vector<2x32xf32>
      %25 = arith.mulf %21, %21 : vector<2x32xf32>
      %26 = arith.subf %24, %25 : vector<2x32xf32>
      %27 = math.exp %22 : vector<2x32xf32>
      %28 = arith.subf %26, %27 : vector<2x32xf32>
      %29 = vector.shape_cast %28 : vector<2x32xf32> to vector<1x2x32xf32>
      %cst_19 = arith.constant dense<0.000000e+00> : vector<1xf32>
      %30 = vector.multi_reduction <add>, %29, %cst_19 [1, 2] : vector<1x2x32xf32> to vector<1xf32>
      %31 = vector.shape_cast %30 : vector<1xf32> to vector<1x1x1xf32>
      %32 = vector.extract %31[0, 0, 0] : f32 from vector<1x1x1xf32>
      %cst_20 = arith.constant -5.000000e-01 : f32
      %33 = arith.mulf %cst_20, %32 : f32
      %34 = arith.addf %20, %33 : f32
      %cst_21 = arith.constant 1.000000e-03 : f32
      %35 = arith.addf %34, %cst_21 : f32
      %c0_22 = arith.constant 0 : index
      %c0_23 = arith.constant 0 : index
      %36 = memref.load %arg5[%c0_22, %c0_23] : memref<1x1xf32, #tpu.memory_space<smem>>
      memref.store %35, %arg5[%c0_22, %c0_23] : memref<1x1xf32, #tpu.memory_space<smem>>
    } else {
    }
    return
  }
  func.func @transform_0(%arg0: i32) -> (i32, i32) {
    %c0_i32 = arith.constant 0 : i32
    %c0_i32_0 = arith.constant 0 : i32
    return %arg0, %c0_i32 : i32, i32
  }
  func.func @transform_1(%arg0: i32) -> (i32, i32) {
    %c0_i32 = arith.constant 0 : i32
    %c0_i32_0 = arith.constant 0 : i32
    return %arg0, %c0_i32 : i32, i32
  }
  func.func @transform_2(%arg0: i32) -> (i32, i32) {
    %c0_i32 = arith.constant 0 : i32
    %c0_i32_0 = arith.constant 0 : i32
    %c0_i32_1 = arith.constant 0 : i32
    return %c0_i32, %c0_i32_0 : i32, i32
  }
  func.func @transform_3(%arg0: i32) -> (i32, i32) {
    %c0_i32 = arith.constant 0 : i32
    %c0_i32_0 = arith.constant 0 : i32
    %c0_i32_1 = arith.constant 0 : i32
    return %c0_i32, %c0_i32_0 : i32, i32
  }
  func.func @transform_4(%arg0: i32) -> (i32, i32) {
    %c0_i32 = arith.constant 0 : i32
    %c0_i32_0 = arith.constant 0 : i32
    %c0_i32_1 = arith.constant 0 : i32
    return %c0_i32, %c0_i32_0 : i32, i32
  }
}

</mosaic_0001>

<llo_original>
// kernel: tpu_custom_call.1
$region0: #{tpu_custom_call.1}
  #allocation0 [shape = 'u32[]', space=smem, size = 0x4, offset = 0x4, fixed_abs, tag = 'smem constant byte address 0x4 - core index']
  #allocation1 [shape = 'u32[144,128]{1,0:T(1,128)}', space=vmem, size = 0x12000, scoped, tag = 'internal scratch']
  #allocation2 [shape = 'f32[8,512]{1,0:T(8,128)}', space=vmem, size = 0x4000, scoped, tag = 'scratch operand']
  %s0 = inlined_call_operand.hbm [shape: f32[8,512], index: 0, kind: input, shape index: {}]
  %s1 = inlined_call_operand.hbm [shape: f32[8,512], index: 1, kind: input, shape index: {}]
  %s2 = inlined_call_operand.vmem [shape: f32[2,32], index: 2, kind: input, shape index: {}]
  %s3 = inlined_call_operand.vmem [shape: f32[2,32], index: 3, kind: input, shape index: {}]
  %s4 = inlined_call_operand.hbm [shape: f32[1,1], index: 4, kind: output, shape index: {}]
  %s5 = sld [smem:[#allocation0]]
  $region42: #{tpu_custom_call.1} parent=0
    _
  %s7 = ssub.s32 1, %s5
  %s8 = scalar_select 0, %s7, %s5
  $region1: #{tpu_custom_call.1} parent=0
    #allocation3 [shape = 'u8[16384]{0}', space=vmem, size = 0x4000, scoped, tag = 'input window, operand 0, single buffered']
    #allocation4 [shape = 's32[1]{0}', space=sflag, size = 0x4, scoped, tag = 'scoped memory for tpu_custom_call.1']
    #allocation5 [shape = 's32[1]{0}', space=sflag, size = 0x4, scoped, tag = 'scoped memory for tpu_custom_call.1']
    #allocation6 [shape = 'u8[16384]{0}', space=vmem, size = 0x4000, scoped, tag = 'input window, operand 1, single buffered']
    #allocation7 [shape = 's32[1]{0}', space=sflag, size = 0x4, scoped, tag = 'scoped memory for tpu_custom_call.1']
    #allocation8 [shape = 'u8[512]{0}', space=smem, size = 0x200, scoped, tag = 'output window, operand 0, single buffered']
    %9 = vsyncpa [#allocation4], 0
    %10 = vsyncpa [#allocation7], 0
    %11 = vsyncpa [#allocation5], 0
    // Predicated region
    $region2: #{tpu_custom_call.1} parent=1 // pred_check
      _
    $region3: #{tpu_custom_call.1} parent=1 // pred_check_branch
      %13 = sbr.rel (0) target = $region5
    $region4: #{tpu_custom_call.1} parent=1 // pred_region
      %s15 = ssub.s32 512, 512
      %16 = vsyncadd [#allocation4], %s15
      %s18 = sshll.u32 [#allocation3], 4
      %s19 = int_to_ptr.vmem [resolvable:$true] %s18
      %21 = dma.hbm_to_vmem [thread:$0]  %s0, 512, %s19, [#allocation4]
    $region5: #{tpu_custom_call.1} parent=1 // pred_fallthru
      _
    // Predicated region
    $region6: #{tpu_custom_call.1} parent=1 // pred_check
      _
    $region7: #{tpu_custom_call.1} parent=1 // pred_check_branch
      %23 = sbr.rel (0) target = $region9
    $region8: #{tpu_custom_call.1} parent=1 // pred_region
      %s25 = ssub.s32 512, 512
      %26 = vsyncadd [#allocation7], %s25
      %s28 = sshll.u32 [#allocation6], 4
      %s29 = int_to_ptr.vmem [resolvable:$true] %s28
      %31 = dma.hbm_to_vmem [thread:$0]  %s1, 512, %s29, [#allocation7]
    $region9: #{tpu_custom_call.1} parent=1 // pred_fallthru
      _
    // Predicated region
    $region10: #{tpu_custom_call.1} parent=1 // pred_check
      _
    $region11: #{tpu_custom_call.1} parent=1 // pred_check_branch
      %33 = sbr.rel (0) target = $region13
    $region12: #{tpu_custom_call.1} parent=1 // pred_region
      _
    $region13: #{tpu_custom_call.1} parent=1 // pred_fallthru
      _
    // Predicated region
    $region14: #{tpu_custom_call.1} parent=1 // pred_check
      _
    $region15: #{tpu_custom_call.1} parent=1 // pred_check_branch
      %35 = sbr.rel (0) target = $region17
    $region16: #{tpu_custom_call.1} parent=1 // pred_region
      _
    $region17: #{tpu_custom_call.1} parent=1 // pred_fallthru
      _
    // Predicated region
    $region18: #{tpu_custom_call.1} parent=1 // pred_check
      _
    $region19: #{tpu_custom_call.1} parent=1 // pred_check_branch
      %37 = sbr.rel (0) target = $region21
    $region20: #{tpu_custom_call.1} parent=1 // pred_region
      %38 = dma.done [#allocation4], 512
    $region21: #{tpu_custom_call.1} parent=1 // pred_fallthru
      _
    // Predicated region
    $region22: #{tpu_custom_call.1} parent=1 // pred_check
      _
    $region23: #{tpu_custom_call.1} parent=1 // pred_check_branch
      %40 = sbr.rel (0) target = $region25
    $region24: #{tpu_custom_call.1} parent=1 // pred_region
      %41 = dma.done [#allocation7], 512
    $region25: #{tpu_custom_call.1} parent=1 // pred_fallthru
      _
    %p42 = scmp.eq.s32.totalorder 0, 0
    // Predicated region
    $region26: #{tpu_custom_call.1} parent=1 // pred_check
      %p43 = pneg %p42
    $region27: #{tpu_custom_call.1} parent=1 // pred_check_branch
      %45 = sbr.rel (%p43) target = $region29
    $region28: #{tpu_custom_call.1} parent=1 // pred_region
      %46 = vst [vmem:[#allocation2] sm:$0xff] 0.0
      %47 = vst [vmem:[#allocation2 + $0x8] sm:$0xff] 0.0
      %48 = vst [vmem:[#allocation2 + $0x10] sm:$0xff] 0.0
      %49 = vst [vmem:[#allocation2 + $0x18] sm:$0xff] 0.0
    $region29: #{tpu_custom_call.1} parent=1 // pred_fallthru
      _
    %v50 = vld [vmem:[#allocation3] sm:$0xff]
    %v51 = vld [vmem:[#allocation3 + $0x8] sm:$0xff]
    %v52 = vld [vmem:[#allocation3 + $0x10] sm:$0xff]
    %v53 = vld [vmem:[#allocation3 + $0x18] sm:$0xff]
    %v54 = vld [vmem:[#allocation6] sm:$0xff]
    %v55 = vld [vmem:[#allocation6 + $0x8] sm:$0xff]
    %v56 = vld [vmem:[#allocation6 + $0x10] sm:$0xff]
    %v57 = vld [vmem:[#allocation6 + $0x18] sm:$0xff]
    %v58 = vsub.f32 %v50, %v54
    %v59 = vsub.f32 %v51, %v55
    %v60 = vsub.f32 %v52, %v56
    %v61 = vsub.f32 %v53, %v57
    %v62 = vmul.f32 %v58, %v58
    %v63 = vmul.f32 %v59, %v59
    %v64 = vmul.f32 %v60, %v60
    %v65 = vmul.f32 %v61, %v61
    %v66 = vadd.f32 %v62, 0.0
    %v67 = vadd.f32 %v63, 0.0
    %v68 = vadd.f32 %v64, 0.0
    %v69 = vadd.f32 %v65, 0.0
    %v70 = vld [vmem:[#allocation2] sm:$0xff]
    %v71 = vld [vmem:[#allocation2 + $0x8] sm:$0xff]
    %v72 = vld [vmem:[#allocation2 + $0x10] sm:$0xff]
    %v73 = vld [vmem:[#allocation2 + $0x18] sm:$0xff]
    %v74 = vadd.f32 %v70, %v66
    %v75 = vadd.f32 %v71, %v67
    %v76 = vadd.f32 %v72, %v68
    %v77 = vadd.f32 %v73, %v69
    %78 = vst [vmem:[#allocation2] sm:$0xff] %v74
    %79 = vst [vmem:[#allocation2 + $0x8] sm:$0xff] %v75
    %80 = vst [vmem:[#allocation2 + $0x10] sm:$0xff] %v76
    %81 = vst [vmem:[#allocation2 + $0x18] sm:$0xff] %v77
    // Predicated region
    $region30: #{tpu_custom_call.1} parent=1 // pred_check
      %p82 = pneg %p42
    $region31: #{tpu_custom_call.1} parent=1 // pred_check_branch
      %84 = sbr.rel (%p82) target = $region33
    $region32: #{tpu_custom_call.1} parent=1 // pred_region
      %v85 = vld [vmem:[#allocation2] sm:$0xff]
      %v86 = vld [vmem:[#allocation2 + $0x8] sm:$0xff]
      %v87 = vld [vmem:[#allocation2 + $0x10] sm:$0xff]
      %v88 = vld [vmem:[#allocation2 + $0x18] sm:$0xff]
      %v89 = vadd.f32 %v85, %v86
      %v90 = vadd.f32 %v89, %v87
      %v91 = vadd.f32 %v90, %v88
      %92 = vadd.xlane.f32.xlu0 %v91
      %v93 = vpop.xlane.xlu0 %92
      %v94 = vrot.slane %v93, 4
      %v95 = vadd.f32 %v93, %v94
      %v96 = vrot.slane %v95, 2
      %v97 = vadd.f32 %v95, %v96
      %v98 = vrot.slane %v97, 1
      %v99 = vadd.f32 %v97, %v98
      %s100 = vtos %v99
      %v101 = vrcp.pop 2.0
      %s102 = vtos %v101
      %s103 = smul.f32 %s100, %s102
      %v104 = vld [vmem:[%s2] sm:$0x3]
      %v105 = vld [vmem:[%s3] sm:$0x3]
      %v106 = vadd.f32 %v105, 1.0
      %v107 = vmul.f32 %v104, %v104
      %v108 = vsub.f32 %v106, %v107
      %v109 = vmul.f32 %v105, 1.442695
      %v110 = vpow.pop %v109
      %v111 = vsub.f32 %v108, %v110
      %vm112 = vcmask 254976
      %v113 = vsel %vm112, %v111, 0.0
      %114 = vadd.xlane.f32.xlu0 %v113
      %v115 = vpop.xlane.xlu0 %114
      %v116 = vrot.slane %v115, 4
      %v117 = vadd.f32 %v115, %v116
      %v118 = vrot.slane %v117, 2
      %v119 = vadd.f32 %v117, %v118
      %v120 = vrot.slane %v119, 1
      %v121 = vadd.f32 %v119, %v120
      %s122 = vtos %v121
      %s123 = smul.f32 %s122, -0.5
      %s124 = sadd.f32 %s103, %s123
      %s125 = sadd.f32 %s124, 0.001
      %s126 = scalar_lea.smem [#allocation8], 0
      %127 = sst [smem:[%s126]] %s125
    $region33: #{tpu_custom_call.1} parent=1 // pred_fallthru
      _
    // Predicated region
    $region34: #{tpu_custom_call.1} parent=1 // pred_check
      _
    $region35: #{tpu_custom_call.1} parent=1 // pred_check_branch
      %129 = sbr.rel (0) target = $region37
    $region36: #{tpu_custom_call.1} parent=1 // pred_region
      %s131 = ssub.s32 16, 16
      %132 = vsyncadd [#allocation5], %s131
      %135 = dma.smem_to_hbm [#allocation8], 16, %s4, [#allocation5]
    $region37: #{tpu_custom_call.1} parent=1 // pred_fallthru
      _
    // Predicated region
    $region38: #{tpu_custom_call.1} parent=1 // pred_check
      _
    $region39: #{tpu_custom_call.1} parent=1 // pred_check_branch
      %137 = sbr.rel (0) target = $region41
    $region40: #{tpu_custom_call.1} parent=1 // pred_region
      %138 = dma.done [#allocation5], 16
    $region41: #{tpu_custom_call.1} parent=1 // pred_fallthru
      _
    %139 = sfence
    %140 = vsyncpa [#allocation4], 1
    %141 = vsyncpa [#allocation7], 1
    %142 = vsyncpa [#allocation5], 1

</llo_original>
